<compile_context>
chip_gen: v7x
topology: tpu7x:2x2x1
jax: 0.10.0
libtpu: 0.0.40
codegen_flags: <defaults>
</compile_context>

<pallas_src>
import math

import jax
import jax.numpy as jnp
from jax.experimental import pallas as pl
from jax.experimental.pallas import tpu as pltpu

# ---------------- configuration (small, consistent with the module) ----------
B = 2            # batch
S = 8            # sequence length
H = 32           # hid_dim
NH = 4           # n_heads
HD = H // NH     # head_dim
PF = 64          # pf_dim
BS = B * S       # flattened rows
EPS = 1e-5       # nn.LayerNorm default eps
NEG = -1e10      # masked_fill value

_NT = (((1,), (1,)), ((), ()))   # contract last dims: q @ k^T without transpose


def encoder_layer_kernel(
    x_ref,      # (BS, H)   f32 flattened activations
    bias_ref,   # (BS, BS)  f32 additive attention mask (0 keep / -1e10 masked)
    wqkv_ref,   # (H, 3H)   bf16  [wq*inv_scale | wk | wv]
    wo_ref,     # (H, H)    bf16
    w1_ref,     # (H, PF)   bf16
    w2_ref,     # (PF, H)   bf16
    vec_ref,    # (8, 128)  f32 packed: [bqkv | bo | g1 | be1 | b1 | b2 | g2 | be2]
    out_ref,    # (BS, H)   f32
):
    x = x_ref[...]                         # (BS, H) f32
    bias = bias_ref[...]                   # (BS, BS) f32
    vec = vec_ref[...]                     # (8, 128) f32, loaded once

    bqkv = vec[0:1, : 3 * H]               # (1, 96)
    bo   = vec[1:2, :H]
    g1   = vec[2:3, :H]
    be1  = vec[3:4, :H]
    b1   = vec[4:5, :PF]
    b2   = vec[5:6, :H]
    g2   = vec[6:7, :H]
    be2  = vec[7:8, :H]

    # ---- fused QKV projection: one (BS,H)@(H,3H) bf16 matmul, f32 accum ----
    qkv = jnp.dot(x.astype(jnp.bfloat16), wqkv_ref[...],
                  preferred_element_type=jnp.float32) + bqkv      # (BS, 3H) f32
    qkv_bf = qkv.astype(jnp.bfloat16)

    # ---- per-head attention (static lane slices, heads statically unrolled) ----
    ctx_heads = []
    for h in range(NH):
        q = qkv_bf[:, h * HD:(h + 1) * HD]                        # (BS, HD)
        k = qkv_bf[:, H + h * HD:H + (h + 1) * HD]                # (BS, HD)
        v = qkv_bf[:, 2 * H + h * HD:2 * H + (h + 1) * HD]        # (BS, HD)

        # scores: contract last dims (no explicit transpose); scale pre-folded.
        s = jax.lax.dot_general(q, k, _NT,
                                preferred_element_type=jnp.float32)   # (BS, BS)
        s = s + bias

        # exact softmax in f32 (no approximate reciprocal)
        m = jnp.max(s, axis=-1, keepdims=True)
        p = jnp.exp(s - m)
        alpha = p / jnp.sum(p, axis=-1, keepdims=True)

        ctx_heads.append(jnp.dot(alpha.astype(jnp.bfloat16), v,
                                 preferred_element_type=jnp.float32))  # (BS, HD)

    # ---- single output projection: (BS,H) @ (H,H) ----
    ctx = jnp.concatenate(ctx_heads, axis=-1)                     # (BS, H) f32
    attn = jnp.dot(ctx.astype(jnp.bfloat16), wo_ref[...],
                   preferred_element_type=jnp.float32) + bo       # (BS, H)

    # ---- residual + LayerNorm 1 (f32) ----
    y = x + attn
    mu = jnp.mean(y, axis=-1, keepdims=True)
    var = jnp.mean((y - mu) ** 2, axis=-1, keepdims=True)
    y1 = (y - mu) * jax.lax.rsqrt(var + EPS) * g1 + be1

    # ---- feed forward (bf16 operands, f32 accum) ----
    h1 = jnp.maximum(
        jnp.dot(y1.astype(jnp.bfloat16), w1_ref[...],
                preferred_element_type=jnp.float32) + b1, 0.0)    # (BS, PF)
    ff = jnp.dot(h1.astype(jnp.bfloat16), w2_ref[...],
                 preferred_element_type=jnp.float32) + b2         # (BS, H)

    # ---- residual + LayerNorm 2 (f32) ----
    z = y1 + ff
    mu2 = jnp.mean(z, axis=-1, keepdims=True)
    var2 = jnp.mean((z - mu2) ** 2, axis=-1, keepdims=True)
    out_ref[...] = ((z - mu2) * jax.lax.rsqrt(var2 + EPS) * g2 + be2).astype(out_ref.dtype)


def encoder_layer(src, src_mask, params):
    """src: (B, S, H) f32, src_mask: (B, 1, S) f32 (1=keep, 0=mask)."""
    (wq, bq, wk, bk, wv, bv, wo, bo, g1, be1, w1, b1, w2, b2, g2, be2) = params

    inv_scale = jnp.float32(1.0 / math.sqrt(HD))

    # Fold 1/sqrt(head_dim) into the q projection; ship weights as bf16, fused.
    wqkv = jnp.concatenate([wq * inv_scale, wk, wv], axis=1).astype(jnp.bfloat16)  # (H, 3H)
    bqkv = jnp.concatenate([bq * inv_scale, bk, bv], axis=1)                       # (1, 3H) f32
    wo_bf = wo.astype(jnp.bfloat16)
    w1_bf = w1.astype(jnp.bfloat16)
    w2_bf = w2.astype(jnp.bfloat16)

    # Pack all tiny vectors into one lane-dense (8, 128) f32 slab (one row each).
    def row(v):                       # (1, n) -> (1, 128), zero-padded
        return jnp.pad(v, ((0, 0), (0, 128 - v.shape[1])))
    vec = jnp.concatenate(
        [row(bqkv), row(bo), row(g1), row(be1), row(b1), row(b2), row(g2), row(be2)],
        axis=0)                                                                    # (8, 128)

    x2d = src.reshape(BS, H)

    # Additive block-diagonal attention bias: 0 where (same batch AND key kept),
    # -1e10 otherwise (masked key or cross-batch pair). Built wrapper-side (XLA).
    keep = src_mask[:, 0, :]                                  # (B, S)
    same_batch = jnp.eye(B, dtype=jnp.float32)                # (B, B)
    keep_blk = same_batch[:, :, None] * keep[None, :, :]      # (Bq, Bk, Sk)
    keep_full = jnp.broadcast_to(keep_blk[:, None, :, :], (B, S, B, S)).reshape(BS, BS)
    bias = jnp.where(keep_full > 0, 0.0, NEG).astype(jnp.float32)

    vmem = pl.BlockSpec(memory_space=pltpu.MemorySpace.VMEM)  # whole array resident in VMEM
    out = pl.pallas_call(
        encoder_layer_kernel,
        out_shape=jax.ShapeDtypeStruct((BS, H), jnp.float32),
        in_specs=[vmem] * 7,
        out_specs=vmem,
    )(x2d, bias, wqkv, wo_bf, w1_bf, w2_bf, vec)

    return out.reshape(B, S, H)


def reference(src, src_mask, params):
    """Pure-JAX f32 reference mirroring the PyTorch forward (dropout = identity).

    Uses Precision.HIGHEST so it is a true f32 ground truth regardless of the
    backend's default matmul precision."""
    (wq, bq, wk, bk, wv, bv, wo, bo, g1, be1, w1, b1, w2, b2, g2, be2) = params
    P = jax.lax.Precision.HIGHEST
    x = src
    q = jnp.dot(x, wq, precision=P) + bq
    k = jnp.dot(x, wk, precision=P) + bk
    v = jnp.dot(x, wv, precision=P) + bv

    def heads(a):  # (B,S,H) -> (B,NH,S,HD)
        return a.reshape(B, S, NH, HD).transpose(0, 2, 1, 3)

    Q, K, V = heads(q), heads(k), heads(v)
    score = jnp.einsum("bhqd,bhkd->bhqk", Q, K, precision=P) / math.sqrt(HD)
    m = src_mask[:, None, :, :]  # (B,1,1,S)
    score = jnp.where(m == 0, NEG, score)
    alpha = jax.nn.softmax(score, axis=-1)
    ctx = jnp.einsum("bhqk,bhkd->bhqd", alpha, V, precision=P)
    ctx = ctx.transpose(0, 2, 1, 3).reshape(B, S, H)
    attn = jnp.dot(ctx, wo, precision=P) + bo

    def ln(y, g, be):
        mu = y.mean(-1, keepdims=True)
        var = ((y - mu) ** 2).mean(-1, keepdims=True)
        return (y - mu) / jnp.sqrt(var + EPS) * g + be

    y1 = ln(x + attn, g1, be1)
    h1 = jnp.maximum(jnp.dot(y1, w1, precision=P) + b1, 0.0)
    ff = jnp.dot(h1, w2, precision=P) + b2
    return ln(y1 + ff, g2, be2)


def init_params(key):
    ks = jax.random.split(key, 8)

    def lin(k, din, dout):
        w = jax.random.normal(k, (din, dout), jnp.float32) * (1.0 / math.sqrt(din))
        b = jnp.zeros((1, dout), jnp.float32)
        return w, b

    wq, bq = lin(ks[0], H, H)
    wk, bk = lin(ks[1], H, H)
    wv, bv = lin(ks[2], H, H)
    wo, bo = lin(ks[3], H, H)
    w1, b1 = lin(ks[4], H, PF)
    w2, b2 = lin(ks[5], PF, H)
    g1 = jnp.ones((1, H), jnp.float32)
    be1 = jnp.zeros((1, H), jnp.float32)
    g2 = jnp.ones((1, H), jnp.float32)
    be2 = jnp.zeros((1, H), jnp.float32)
    return (wq, bq, wk, bk, wv, bv, wo, bo, g1, be1, w1, b1, w2, b2, g2, be2)


if __name__ == "__main__":
    key = jax.random.PRNGKey(0)
    k_src, k_par = jax.random.split(key)

    src = jax.random.normal(k_src, (B, S, H), jnp.float32)
    # key-padding mask: batch 0 fully valid, batch 1 masks the last two keys
    src_mask = jnp.ones((B, 1, S), jnp.float32)
    src_mask = src_mask.at[1, 0, -2:].set(0.0)

    params = init_params(k_par)

    out = jax.block_until_ready(encoder_layer(src, src_mask, params))

    ref = reference(src, src_mask, params)
    assert out.shape == (B, S, H)
    # Tolerance covers bf16 MXU operands (f32 accumulation) per the perf review;
    # softmax/LayerNorm/residuals are exact f32, so observed error is ~1e-3.
    assert jnp.all(jnp.isfinite(out)), "non-finite output"
    assert jnp.allclose(out, ref, atol=1e-2, rtol=1e-2), "mismatch vs reference"

    print("KERNEL_OK")
</pallas_src>

<mosaic_0001>
module attributes {stable_mosaic.version = 11 : i64} {
  func.func @encoder_layer_kernel(%arg0: memref<16x32xf32, #tpu.memory_space<vmem>>, %arg1: memref<16x16xf32, #tpu.memory_space<vmem>>, %arg2: memref<32x96xbf16, #tpu.memory_space<vmem>>, %arg3: memref<32x32xbf16, #tpu.memory_space<vmem>>, %arg4: memref<32x64xbf16, #tpu.memory_space<vmem>>, %arg5: memref<64x32xbf16, #tpu.memory_space<vmem>>, %arg6: memref<8x128xf32, #tpu.memory_space<vmem>>, %arg7: memref<16x32xf32, #tpu.memory_space<vmem>>) attributes {dimension_semantics = [], scalar_prefetch = 0 : i64, scratch_operands = 0 : i64, tpu.core_type = #tpu.core_type<tc>} {
    %c0 = arith.constant 0 : index
    %c0_0 = arith.constant 0 : index
    %0 = vector.load %arg0[%c0, %c0_0] : memref<16x32xf32, #tpu.memory_space<vmem>>, vector<16x32xf32>
    %c0_1 = arith.constant 0 : index
    %c0_2 = arith.constant 0 : index
    %1 = vector.load %arg1[%c0_1, %c0_2] : memref<16x16xf32, #tpu.memory_space<vmem>>, vector<16x16xf32>
    %c0_3 = arith.constant 0 : index
    %c0_4 = arith.constant 0 : index
    %2 = vector.load %arg6[%c0_3, %c0_4] : memref<8x128xf32, #tpu.memory_space<vmem>>, vector<8x128xf32>
    %3 = vector.extract_strided_slice %2 {offsets = [0, 0], sizes = [1, 96], strides = [1, 1]} : vector<8x128xf32> to vector<1x96xf32>
    %4 = vector.extract_strided_slice %2 {offsets = [1, 0], sizes = [1, 32], strides = [1, 1]} : vector<8x128xf32> to vector<1x32xf32>
    %5 = vector.extract_strided_slice %2 {offsets = [2, 0], sizes = [1, 32], strides = [1, 1]} : vector<8x128xf32> to vector<1x32xf32>
    %6 = vector.extract_strided_slice %2 {offsets = [3, 0], sizes = [1, 32], strides = [1, 1]} : vector<8x128xf32> to vector<1x32xf32>
    %7 = vector.extract_strided_slice %2 {offsets = [4, 0], sizes = [1, 64], strides = [1, 1]} : vector<8x128xf32> to vector<1x64xf32>
    %8 = vector.extract_strided_slice %2 {offsets = [5, 0], sizes = [1, 32], strides = [1, 1]} : vector<8x128xf32> to vector<1x32xf32>
    %9 = vector.extract_strided_slice %2 {offsets = [6, 0], sizes = [1, 32], strides = [1, 1]} : vector<8x128xf32> to vector<1x32xf32>
    %10 = vector.extract_strided_slice %2 {offsets = [7, 0], sizes = [1, 32], strides = [1, 1]} : vector<8x128xf32> to vector<1x32xf32>
    %11 = arith.truncf %0 : vector<16x32xf32> to vector<16x32xbf16>
    %c0_5 = arith.constant 0 : index
    %c0_6 = arith.constant 0 : index
    %12 = vector.load %arg2[%c0_5, %c0_6] : memref<32x96xbf16, #tpu.memory_space<vmem>>, vector<32x96xbf16>
    %cst = arith.constant dense<0.000000e+00> : vector<16x96xf32>
    %13 = tpu.matmul %11, %12, %cst {dimension_numbers = #tpu.dot_dimension_numbers<[1], [0], [0], [1], [0, 0, 1, 1], [], []>} : vector<16x32xbf16>, vector<32x96xbf16>, vector<16x96xf32> -> vector<16x96xf32>
    %14 = vector.broadcast %3 : vector<1x96xf32> to vector<16x96xf32>
    %15 = arith.addf %13, %14 : vector<16x96xf32>
    %16 = arith.truncf %15 : vector<16x96xf32> to vector<16x96xbf16>
    %17 = vector.extract_strided_slice %16 {offsets = [0, 0], sizes = [16, 8], strides = [1, 1]} : vector<16x96xbf16> to vector<16x8xbf16>
    %18 = vector.extract_strided_slice %16 {offsets = [0, 32], sizes = [16, 8], strides = [1, 1]} : vector<16x96xbf16> to vector<16x8xbf16>
    %19 = vector.extract_strided_slice %16 {offsets = [0, 64], sizes = [16, 8], strides = [1, 1]} : vector<16x96xbf16> to vector<16x8xbf16>
    %cst_7 = arith.constant dense<0.000000e+00> : vector<16x16xf32>
    %20 = tpu.matmul %17, %18, %cst_7 {dimension_numbers = #tpu.dot_dimension_numbers<[1], [1], [0], [0], [0, 0, 1, 0], [], []>} : vector<16x8xbf16>, vector<16x8xbf16>, vector<16x16xf32> -> vector<16x16xf32>
    %21 = arith.addf %20, %1 : vector<16x16xf32>
    %cst_8 = arith.constant dense<0xFF800000> : vector<16xf32>
    %22 = vector.multi_reduction <maximumf>, %21, %cst_8 [1] : vector<16x16xf32> to vector<16xf32>
    %23 = vector.shape_cast %22 : vector<16xf32> to vector<16x1xf32>
    %24 = vector.broadcast %23 : vector<16x1xf32> to vector<16x16xf32>
    %25 = arith.subf %21, %24 : vector<16x16xf32>
    %26 = math.exp %25 : vector<16x16xf32>
    %cst_9 = arith.constant dense<0.000000e+00> : vector<16xf32>
    %27 = vector.multi_reduction <add>, %26, %cst_9 [1] : vector<16x16xf32> to vector<16xf32>
    %28 = vector.shape_cast %27 : vector<16xf32> to vector<16x1xf32>
    %29 = vector.broadcast %28 : vector<16x1xf32> to vector<16x16xf32>
    %30 = arith.divf %26, %29 : vector<16x16xf32>
    %31 = arith.truncf %30 : vector<16x16xf32> to vector<16x16xbf16>
    %cst_10 = arith.constant dense<0.000000e+00> : vector<16x8xf32>
    %32 = tpu.matmul %31, %19, %cst_10 {dimension_numbers = #tpu.dot_dimension_numbers<[1], [0], [0], [1], [0, 0, 1, 1], [], []>} : vector<16x16xbf16>, vector<16x8xbf16>, vector<16x8xf32> -> vector<16x8xf32>
    %33 = vector.extract_strided_slice %16 {offsets = [0, 8], sizes = [16, 8], strides = [1, 1]} : vector<16x96xbf16> to vector<16x8xbf16>
    %34 = vector.extract_strided_slice %16 {offsets = [0, 40], sizes = [16, 8], strides = [1, 1]} : vector<16x96xbf16> to vector<16x8xbf16>
    %35 = vector.extract_strided_slice %16 {offsets = [0, 72], sizes = [16, 8], strides = [1, 1]} : vector<16x96xbf16> to vector<16x8xbf16>
    %cst_11 = arith.constant dense<0.000000e+00> : vector<16x16xf32>
    %36 = tpu.matmul %33, %34, %cst_11 {dimension_numbers = #tpu.dot_dimension_numbers<[1], [1], [0], [0], [0, 0, 1, 0], [], []>} : vector<16x8xbf16>, vector<16x8xbf16>, vector<16x16xf32> -> vector<16x16xf32>
    %37 = arith.addf %36, %1 : vector<16x16xf32>
    %cst_12 = arith.constant dense<0xFF800000> : vector<16xf32>
    %38 = vector.multi_reduction <maximumf>, %37, %cst_12 [1] : vector<16x16xf32> to vector<16xf32>
    %39 = vector.shape_cast %38 : vector<16xf32> to vector<16x1xf32>
    %40 = vector.broadcast %39 : vector<16x1xf32> to vector<16x16xf32>
    %41 = arith.subf %37, %40 : vector<16x16xf32>
    %42 = math.exp %41 : vector<16x16xf32>
    %cst_13 = arith.constant dense<0.000000e+00> : vector<16xf32>
    %43 = vector.multi_reduction <add>, %42, %cst_13 [1] : vector<16x16xf32> to vector<16xf32>
    %44 = vector.shape_cast %43 : vector<16xf32> to vector<16x1xf32>
    %45 = vector.broadcast %44 : vector<16x1xf32> to vector<16x16xf32>
    %46 = arith.divf %42, %45 : vector<16x16xf32>
    %47 = arith.truncf %46 : vector<16x16xf32> to vector<16x16xbf16>
    %cst_14 = arith.constant dense<0.000000e+00> : vector<16x8xf32>
    %48 = tpu.matmul %47, %35, %cst_14 {dimension_numbers = #tpu.dot_dimension_numbers<[1], [0], [0], [1], [0, 0, 1, 1], [], []>} : vector<16x16xbf16>, vector<16x8xbf16>, vector<16x8xf32> -> vector<16x8xf32>
    %49 = vector.extract_strided_slice %16 {offsets = [0, 16], sizes = [16, 8], strides = [1, 1]} : vector<16x96xbf16> to vector<16x8xbf16>
    %50 = vector.extract_strided_slice %16 {offsets = [0, 48], sizes = [16, 8], strides = [1, 1]} : vector<16x96xbf16> to vector<16x8xbf16>
    %51 = vector.extract_strided_slice %16 {offsets = [0, 80], sizes = [16, 8], strides = [1, 1]} : vector<16x96xbf16> to vector<16x8xbf16>
    %cst_15 = arith.constant dense<0.000000e+00> : vector<16x16xf32>
    %52 = tpu.matmul %49, %50, %cst_15 {dimension_numbers = #tpu.dot_dimension_numbers<[1], [1], [0], [0], [0, 0, 1, 0], [], []>} : vector<16x8xbf16>, vector<16x8xbf16>, vector<16x16xf32> -> vector<16x16xf32>
    %53 = arith.addf %52, %1 : vector<16x16xf32>
    %cst_16 = arith.constant dense<0xFF800000> : vector<16xf32>
    %54 = vector.multi_reduction <maximumf>, %53, %cst_16 [1] : vector<16x16xf32> to vector<16xf32>
    %55 = vector.shape_cast %54 : vector<16xf32> to vector<16x1xf32>
    %56 = vector.broadcast %55 : vector<16x1xf32> to vector<16x16xf32>
    %57 = arith.subf %53, %56 : vector<16x16xf32>
    %58 = math.exp %57 : vector<16x16xf32>
    %cst_17 = arith.constant dense<0.000000e+00> : vector<16xf32>
    %59 = vector.multi_reduction <add>, %58, %cst_17 [1] : vector<16x16xf32> to vector<16xf32>
    %60 = vector.shape_cast %59 : vector<16xf32> to vector<16x1xf32>
    %61 = vector.broadcast %60 : vector<16x1xf32> to vector<16x16xf32>
    %62 = arith.divf %58, %61 : vector<16x16xf32>
    %63 = arith.truncf %62 : vector<16x16xf32> to vector<16x16xbf16>
    %cst_18 = arith.constant dense<0.000000e+00> : vector<16x8xf32>
    %64 = tpu.matmul %63, %51, %cst_18 {dimension_numbers = #tpu.dot_dimension_numbers<[1], [0], [0], [1], [0, 0, 1, 1], [], []>} : vector<16x16xbf16>, vector<16x8xbf16>, vector<16x8xf32> -> vector<16x8xf32>
    %65 = vector.extract_strided_slice %16 {offsets = [0, 24], sizes = [16, 8], strides = [1, 1]} : vector<16x96xbf16> to vector<16x8xbf16>
    %66 = vector.extract_strided_slice %16 {offsets = [0, 56], sizes = [16, 8], strides = [1, 1]} : vector<16x96xbf16> to vector<16x8xbf16>
    %67 = vector.extract_strided_slice %16 {offsets = [0, 88], sizes = [16, 8], strides = [1, 1]} : vector<16x96xbf16> to vector<16x8xbf16>
    %cst_19 = arith.constant dense<0.000000e+00> : vector<16x16xf32>
    %68 = tpu.matmul %65, %66, %cst_19 {dimension_numbers = #tpu.dot_dimension_numbers<[1], [1], [0], [0], [0, 0, 1, 0], [], []>} : vector<16x8xbf16>, vector<16x8xbf16>, vector<16x16xf32> -> vector<16x16xf32>
    %69 = arith.addf %68, %1 : vector<16x16xf32>
    %cst_20 = arith.constant dense<0xFF800000> : vector<16xf32>
    %70 = vector.multi_reduction <maximumf>, %69, %cst_20 [1] : vector<16x16xf32> to vector<16xf32>
    %71 = vector.shape_cast %70 : vector<16xf32> to vector<16x1xf32>
    %72 = vector.broadcast %71 : vector<16x1xf32> to vector<16x16xf32>
    %73 = arith.subf %69, %72 : vector<16x16xf32>
    %74 = math.exp %73 : vector<16x16xf32>
    %cst_21 = arith.constant dense<0.000000e+00> : vector<16xf32>
    %75 = vector.multi_reduction <add>, %74, %cst_21 [1] : vector<16x16xf32> to vector<16xf32>
    %76 = vector.shape_cast %75 : vector<16xf32> to vector<16x1xf32>
    %77 = vector.broadcast %76 : vector<16x1xf32> to vector<16x16xf32>
    %78 = arith.divf %74, %77 : vector<16x16xf32>
    %79 = arith.truncf %78 : vector<16x16xf32> to vector<16x16xbf16>
    %cst_22 = arith.constant dense<0.000000e+00> : vector<16x8xf32>
    %80 = tpu.matmul %79, %67, %cst_22 {dimension_numbers = #tpu.dot_dimension_numbers<[1], [0], [0], [1], [0, 0, 1, 1], [], []>} : vector<16x16xbf16>, vector<16x8xbf16>, vector<16x8xf32> -> vector<16x8xf32>
    %81 = tpu.concatenate %32, %48, %64, %80 in 1 : vector<16x8xf32>, vector<16x8xf32>, vector<16x8xf32>, vector<16x8xf32> -> vector<16x32xf32>
    %82 = arith.truncf %81 : vector<16x32xf32> to vector<16x32xbf16>
    %c0_23 = arith.constant 0 : index
    %c0_24 = arith.constant 0 : index
    %83 = vector.load %arg3[%c0_23, %c0_24] : memref<32x32xbf16, #tpu.memory_space<vmem>>, vector<32x32xbf16>
    %cst_25 = arith.constant dense<0.000000e+00> : vector<16x32xf32>
    %84 = tpu.matmul %82, %83, %cst_25 {dimension_numbers = #tpu.dot_dimension_numbers<[1], [0], [0], [1], [0, 0, 1, 1], [], []>} : vector<16x32xbf16>, vector<32x32xbf16>, vector<16x32xf32> -> vector<16x32xf32>
    %85 = vector.broadcast %4 : vector<1x32xf32> to vector<16x32xf32>
    %86 = arith.addf %84, %85 : vector<16x32xf32>
    %87 = arith.addf %0, %86 : vector<16x32xf32>
    %cst_26 = arith.constant dense<0.000000e+00> : vector<16xf32>
    %88 = vector.multi_reduction <add>, %87, %cst_26 [1] : vector<16x32xf32> to vector<16xf32>
    %89 = vector.shape_cast %88 : vector<16xf32> to vector<16x1xf32>
    %cst_27 = arith.constant 3.200000e+01 : f32
    %90 = vector.broadcast %cst_27 : f32 to vector<16x1xf32>
    %91 = arith.divf %89, %90 : vector<16x1xf32>
    %92 = vector.broadcast %91 : vector<16x1xf32> to vector<16x32xf32>
    %93 = arith.subf %87, %92 : vector<16x32xf32>
    %94 = arith.mulf %93, %93 : vector<16x32xf32>
    %cst_28 = arith.constant dense<0.000000e+00> : vector<16xf32>
    %95 = vector.multi_reduction <add>, %94, %cst_28 [1] : vector<16x32xf32> to vector<16xf32>
    %96 = vector.shape_cast %95 : vector<16xf32> to vector<16x1xf32>
    %cst_29 = arith.constant 3.200000e+01 : f32
    %97 = vector.broadcast %cst_29 : f32 to vector<16x1xf32>
    %98 = arith.divf %96, %97 : vector<16x1xf32>
    %99 = vector.broadcast %91 : vector<16x1xf32> to vector<16x32xf32>
    %100 = arith.subf %87, %99 : vector<16x32xf32>
    %cst_30 = arith.constant 9.99999974E-6 : f32
    %101 = vector.broadcast %cst_30 : f32 to vector<16x1xf32>
    %102 = arith.addf %98, %101 : vector<16x1xf32>
    %103 = math.rsqrt %102 : vector<16x1xf32>
    %104 = vector.broadcast %103 : vector<16x1xf32> to vector<16x32xf32>
    %105 = arith.mulf %100, %104 : vector<16x32xf32>
    %106 = vector.broadcast %5 : vector<1x32xf32> to vector<16x32xf32>
    %107 = arith.mulf %105, %106 : vector<16x32xf32>
    %108 = vector.broadcast %6 : vector<1x32xf32> to vector<16x32xf32>
    %109 = arith.addf %107, %108 : vector<16x32xf32>
    %110 = arith.truncf %109 : vector<16x32xf32> to vector<16x32xbf16>
    %c0_31 = arith.constant 0 : index
    %c0_32 = arith.constant 0 : index
    %111 = vector.load %arg4[%c0_31, %c0_32] : memref<32x64xbf16, #tpu.memory_space<vmem>>, vector<32x64xbf16>
    %cst_33 = arith.constant dense<0.000000e+00> : vector<16x64xf32>
    %112 = tpu.matmul %110, %111, %cst_33 {dimension_numbers = #tpu.dot_dimension_numbers<[1], [0], [0], [1], [0, 0, 1, 1], [], []>} : vector<16x32xbf16>, vector<32x64xbf16>, vector<16x64xf32> -> vector<16x64xf32>
    %113 = vector.broadcast %7 : vector<1x64xf32> to vector<16x64xf32>
    %114 = arith.addf %112, %113 : vector<16x64xf32>
    %cst_34 = arith.constant 0.000000e+00 : f32
    %115 = vector.broadcast %cst_34 : f32 to vector<16x64xf32>
    %116 = arith.maximumf %114, %115 : vector<16x64xf32>
    %117 = arith.truncf %116 : vector<16x64xf32> to vector<16x64xbf16>
    %c0_35 = arith.constant 0 : index
    %c0_36 = arith.constant 0 : index
    %118 = vector.load %arg5[%c0_35, %c0_36] : memref<64x32xbf16, #tpu.memory_space<vmem>>, vector<64x32xbf16>
    %cst_37 = arith.constant dense<0.000000e+00> : vector<16x32xf32>
    %119 = tpu.matmul %117, %118, %cst_37 {dimension_numbers = #tpu.dot_dimension_numbers<[1], [0], [0], [1], [0, 0, 1, 1], [], []>} : vector<16x64xbf16>, vector<64x32xbf16>, vector<16x32xf32> -> vector<16x32xf32>
    %120 = vector.broadcast %8 : vector<1x32xf32> to vector<16x32xf32>
    %121 = arith.addf %119, %120 : vector<16x32xf32>
    %122 = arith.addf %109, %121 : vector<16x32xf32>
    %cst_38 = arith.constant dense<0.000000e+00> : vector<16xf32>
    %123 = vector.multi_reduction <add>, %122, %cst_38 [1] : vector<16x32xf32> to vector<16xf32>
    %124 = vector.shape_cast %123 : vector<16xf32> to vector<16x1xf32>
    %cst_39 = arith.constant 3.200000e+01 : f32
    %125 = vector.broadcast %cst_39 : f32 to vector<16x1xf32>
    %126 = arith.divf %124, %125 : vector<16x1xf32>
    %127 = vector.broadcast %126 : vector<16x1xf32> to vector<16x32xf32>
    %128 = arith.subf %122, %127 : vector<16x32xf32>
    %129 = arith.mulf %128, %128 : vector<16x32xf32>
    %cst_40 = arith.constant dense<0.000000e+00> : vector<16xf32>
    %130 = vector.multi_reduction <add>, %129, %cst_40 [1] : vector<16x32xf32> to vector<16xf32>
    %131 = vector.shape_cast %130 : vector<16xf32> to vector<16x1xf32>
    %cst_41 = arith.constant 3.200000e+01 : f32
    %132 = vector.broadcast %cst_41 : f32 to vector<16x1xf32>
    %133 = arith.divf %131, %132 : vector<16x1xf32>
    %134 = vector.broadcast %126 : vector<16x1xf32> to vector<16x32xf32>
    %135 = arith.subf %122, %134 : vector<16x32xf32>
    %cst_42 = arith.constant 9.99999974E-6 : f32
    %136 = vector.broadcast %cst_42 : f32 to vector<16x1xf32>
    %137 = arith.addf %133, %136 : vector<16x1xf32>
    %138 = math.rsqrt %137 : vector<16x1xf32>
    %139 = vector.broadcast %138 : vector<16x1xf32> to vector<16x32xf32>
    %140 = arith.mulf %135, %139 : vector<16x32xf32>
    %141 = vector.broadcast %9 : vector<1x32xf32> to vector<16x32xf32>
    %142 = arith.mulf %140, %141 : vector<16x32xf32>
    %143 = vector.broadcast %10 : vector<1x32xf32> to vector<16x32xf32>
    %144 = arith.addf %142, %143 : vector<16x32xf32>
    %c0_43 = arith.constant 0 : index
    %c0_44 = arith.constant 0 : index
    %145 = vector.load %arg7[%c0_43, %c0_44] : memref<16x32xf32, #tpu.memory_space<vmem>>, vector<16x32xf32>
    tpu.vector_store %arg7[%c0_43, %c0_44], %144 {strides = array<i32>} : memref<16x32xf32, #tpu.memory_space<vmem>>, vector<16x32xf32>,
    return
  }
}

</mosaic_0001>

<llo_original>
// kernel: tpu_custom_call.1
$region0: #{tpu_custom_call.1}
  #allocation0 [shape = 'u32[]', space=smem, size = 0x4, offset = 0x4, fixed_abs, tag = 'smem constant byte address 0x4 - core index']
  #allocation1 [shape = 'u32[144,128]{1,0:T(1,128)}', space=vmem, size = 0x12000, scoped, tag = 'internal scratch']
  %s0 = inlined_call_operand.vmem [shape: f32[16,32], index: 0, kind: input, shape index: {}]
  %s1 = inlined_call_operand.vmem [shape: f32[16,16], index: 1, kind: input, shape index: {}]
  %s2 = inlined_call_operand.vmem [shape: bf16[32,96], index: 2, kind: input, shape index: {}]
  %s3 = inlined_call_operand.hbm [shape: bf16[32,32], index: 3, kind: input, shape index: {}]
  %s4 = inlined_call_operand.hbm [shape: bf16[32,64], index: 4, kind: input, shape index: {}]
  %s5 = inlined_call_operand.vmem [shape: bf16[64,32], index: 5, kind: input, shape index: {}]
  %s6 = inlined_call_operand.hbm [shape: f32[8,128], index: 6, kind: input, shape index: {}]
  %s7 = inlined_call_operand.hbm [shape: f32[16,32], index: 7, kind: output, shape index: {}]
  %s8 = sld [smem:[#allocation0]]
  $region50: #{tpu_custom_call.1} parent=0
    _
  %s10 = ssub.s32 1, %s8
  %s11 = scalar_select 0, %s10, %s8
  $region1: #{tpu_custom_call.1} parent=0
    #allocation2 [shape = 'u8[8192]{0}', space=vmem, size = 0x2000, scoped, tag = 'input window, operand 3, single buffered']
    #allocation3 [shape = 's32[1]{0}', space=sflag, size = 0x4, scoped, tag = 'scoped memory for tpu_custom_call.1']
    #allocation4 [shape = 's32[1]{0}', space=sflag, size = 0x4, scoped, tag = 'scoped memory for tpu_custom_call.1']
    #allocation5 [shape = 'u8[8192]{0}', space=vmem, size = 0x2000, scoped, tag = 'input window, operand 4, single buffered']
    #allocation6 [shape = 's32[1]{0}', space=sflag, size = 0x4, scoped, tag = 'scoped memory for tpu_custom_call.1']
    #allocation7 [shape = 'u8[4096]{0}', space=vmem, size = 0x1000, scoped, tag = 'input window, operand 6, single buffered']
    #allocation8 [shape = 'u8[8192]{0}', space=vmem, size = 0x2000, scoped, tag = 'output window, operand 0, single buffered']
    %12 = vsyncpa [#allocation3], 0
    %13 = vsyncpa [#allocation6], 0
    %14 = vsyncpa [#allocation4], 0
    // Predicated region
    $region2: #{tpu_custom_call.1} parent=1 // pred_check
      _
    $region3: #{tpu_custom_call.1} parent=1 // pred_check_branch
      %16 = sbr.rel (0) target = $region5
    $region4: #{tpu_custom_call.1} parent=1 // pred_region
      _
    $region5: #{tpu_custom_call.1} parent=1 // pred_fallthru
      _
    // Predicated region
    $region6: #{tpu_custom_call.1} parent=1 // pred_check
      _
    $region7: #{tpu_custom_call.1} parent=1 // pred_check_branch
      %18 = sbr.rel (0) target = $region9
    $region8: #{tpu_custom_call.1} parent=1 // pred_region
      _
    $region9: #{tpu_custom_call.1} parent=1 // pred_fallthru
      _
    // Predicated region
    $region10: #{tpu_custom_call.1} parent=1 // pred_check
      _
    $region11: #{tpu_custom_call.1} parent=1 // pred_check_branch
      %20 = sbr.rel (0) target = $region13
    $region12: #{tpu_custom_call.1} parent=1 // pred_region
      _
    $region13: #{tpu_custom_call.1} parent=1 // pred_fallthru
      _
    // Predicated region
    $region14: #{tpu_custom_call.1} parent=1 // pred_check
      _
    $region15: #{tpu_custom_call.1} parent=1 // pred_check_branch
      %22 = sbr.rel (0) target = $region17
    $region16: #{tpu_custom_call.1} parent=1 // pred_region
      %s24 = ssub.s32 256, 256
      %25 = vsyncadd [#allocation3], %s24
      %s26 = sshll.u32 [#allocation2], 4
      %s27 = int_to_ptr.vmem [resolvable:$true] %s26
      %32 = dma.hbm_to_vmem [thread:$0]  %s3, 256, %s27, [#allocation3], 64, 64, 4
    $region17: #{tpu_custom_call.1} parent=1 // pred_fallthru
      _
    // Predicated region
    $region18: #{tpu_custom_call.1} parent=1 // pred_check
      _
    $region19: #{tpu_custom_call.1} parent=1 // pred_check_branch
      %34 = sbr.rel (0) target = $region21
    $region20: #{tpu_custom_call.1} parent=1 // pred_region
      %s36 = ssub.s32 256, 256
      %37 = vsyncadd [#allocation6], %s36
      %s38 = sshll.u32 [#allocation5], 4
      %s39 = int_to_ptr.vmem [resolvable:$true] %s38
      %44 = dma.hbm_to_vmem [thread:$0]  %s4, 256, %s39, [#allocation6], 64, 64, 4
    $region21: #{tpu_custom_call.1} parent=1 // pred_fallthru
      _
    // Predicated region
    $region22: #{tpu_custom_call.1} parent=1 // pred_check
      _
    $region23: #{tpu_custom_call.1} parent=1 // pred_check_branch
      %46 = sbr.rel (0) target = $region25
    $region24: #{tpu_custom_call.1} parent=1 // pred_region
      _
    $region25: #{tpu_custom_call.1} parent=1 // pred_fallthru
      _
    // Predicated region
    $region26: #{tpu_custom_call.1} parent=1 // pred_check
      _
    $region27: #{tpu_custom_call.1} parent=1 // pred_check_branch
      %48 = sbr.rel (0) target = $region29
    $region28: #{tpu_custom_call.1} parent=1 // pred_region
      %s50 = ssub.s32 128, 128
      %51 = vsyncadd [#allocation6], %s50
      %s53 = sshll.u32 [#allocation7], 4
      %s54 = int_to_ptr.vmem [resolvable:$true] %s53
      %56 = dma.hbm_to_vmem [thread:$0]  %s6, 128, %s54, [#allocation6]
    $region29: #{tpu_custom_call.1} parent=1 // pred_fallthru
      _
    // Predicated region
    $region30: #{tpu_custom_call.1} parent=1 // pred_check
      _
    $region31: #{tpu_custom_call.1} parent=1 // pred_check_branch
      %58 = sbr.rel (0) target = $region33
    $region32: #{tpu_custom_call.1} parent=1 // pred_region
      %59 = dma.done [#allocation3], 256
    $region33: #{tpu_custom_call.1} parent=1 // pred_fallthru
      _
    // Predicated region
    $region34: #{tpu_custom_call.1} parent=1 // pred_check
      _
    $region35: #{tpu_custom_call.1} parent=1 // pred_check_branch
      %61 = sbr.rel (0) target = $region37
    $region36: #{tpu_custom_call.1} parent=1 // pred_region
      %62 = dma.done [#allocation6], 256
    $region37: #{tpu_custom_call.1} parent=1 // pred_fallthru
      _
    // Predicated region
    $region38: #{tpu_custom_call.1} parent=1 // pred_check
      _
    $region39: #{tpu_custom_call.1} parent=1 // pred_check_branch
      %64 = sbr.rel (0) target = $region41
    $region40: #{tpu_custom_call.1} parent=1 // pred_region
      %65 = dma.done [#allocation6], 128
    $region41: #{tpu_custom_call.1} parent=1 // pred_fallthru
      _
    %v67 = vld [vmem:[%s0] sm:$0xff]
    %v68 = vld [vmem:[%s0 + $0x8] sm:$0xff]
    %v69 = vld [vmem:[%s1] sm:$0xff]
    %v70 = vld [vmem:[%s1 + $0x8] sm:$0xff]
    %v71 = vld [vmem:[#allocation7] sm:$0xff]
    %v72 = vpack.c.bf16 %v68, %v67
    %v73 = vld [vmem:[%s2] sm:$0xf]
    %v74 = vld [vmem:[%s2 + $0x4] sm:$0xf]
    %v75 = vld [vmem:[%s2 + $0x8] sm:$0xf]
    %v76 = vld [vmem:[%s2 + $0xc] sm:$0xf]
    %v77 = vlaneseq
    %v78 = vshrl.u32 %v77, 7
    %v79 = vsub.s32 0, %v78
    %v80 = vrot.slane %v71, %v79
    %v85 = vunpack.c.l.b16 %v73
    %v86 = vunpack.c.l.b16 %v74
    %v87 = vunpack.c.l.b16 %v75
    %v88 = vunpack.c.l.b16 %v76
    %v89 = vpack.c.b16 %v86, %v85
    %v90 = vpack.c.b16 %v88, %v87
    %vm93 = vcmask 261120
    %v95 = vsel %vm93, %v72, 0
    %97 = vmatprep.subr.bf16.mxu0 0
    %98 = vmatpush1.bf16.msra.mxu0 %v89
    %99 = vmatprep.subr.bf16.mxu0 0
    %100 = vmatpush1.bf16.msra.mxu0 %v90
    %101 = vmatprep.subr.bf16.mxu0 0
    %102 = vmatpush1.bf16.msra.mxu0 0
    %103 = vmatprep.subr.bf16.mxu0 0
    %104 = vmatpush1.bf16.msra.mxu0 0
    %105 = vmatprep.subr.bf16.mxu0 0
    %106 = vmatpush1.bf16.msra.mxu0 0
    %107 = vmatprep.subr.bf16.mxu0 0
    %108 = vmatpush1.bf16.msra.mxu0 0
    %109 = vmatprep.subr.bf16.mxu0 0
    %110 = vmatpush1.bf16.msra.mxu0 0
    %111 = vmatprep.subr.bf16.mxu0 0
    %112 = vmatpush1.bf16.msra.mxu0 0
    %113 = vmatprep.subr.bf16.mxu0 0
    %114 = vmatpush1.bf16.msra.mxu0 0
    %115 = vmatprep.subr.bf16.mxu0 0
    %116 = vmatpush1.bf16.msra.mxu0 0
    %117 = vmatprep.subr.bf16.mxu0 0
    %118 = vmatpush1.bf16.msra.mxu0 0
    %119 = vmatprep.subr.bf16.mxu0 0
    %120 = vmatpush1.bf16.msra.mxu0 0
    %121 = vmatprep.subr.bf16.mxu0 0
    %122 = vmatpush1.bf16.msra.mxu0 0
    %123 = vmatprep.subr.bf16.mxu0 0
    %124 = vmatpush1.bf16.msra.mxu0 0
    %125 = vmatprep.subr.bf16.mxu0 0
    %126 = vmatpush1.bf16.msra.mxu0 0
    %127 = vmatprep.subr.bf16.mxu0 0
    %128 = vmatpush1.bf16.msra.mxu0 0
    %129 = vmatprep.mubr.bf16.mxu0 0
    %130 = vmatmul.mubr.bf16.gmra.mrb[0].mxu0 %v95
    %v131 = vpop.f32.mrb[0].mxu0
    %v132 = vadd.f32 %v80, %v131
    %v133 = vpop.f32.mrb[0].mxu0
    %v134 = vpop.f32.mrb[0].mxu0
    %v135 = vadd.f32 %v80, %v134
    %v136 = vpop.f32.mrb[0].mxu0
    %137 = vdwg.mxu0
    %v138 = vpack.c.bf16 %v135, %v132
    %140 = vrot.lane.b32.xlu0 %v138, 96
    %v141 = vpop.permute.xlu0 %140
    %vm142 = vcmask 64512
    %v144 = vsel %vm142, %v138, 0
    %v147 = vsel %vm142, %v141, 0
    %149 = vmatprep.subr.bf16.mxu0 0
    %150 = vmatpush1.bf16.xpose.msra.mxu0 %v147
    %151 = vmatprep.subr.bf16.mxu0 0
    %152 = vmatpush1.bf16.xpose.msra.mxu0 0
    %153 = vmatprep.subr.bf16.mxu0 0
    %154 = vmatpush1.bf16.xpose.msra.mxu0 0
    %155 = vmatprep.subr.bf16.mxu0 0
    %156 = vmatpush1.bf16.xpose.msra.mxu0 0
    %157 = vmatprep.subr.bf16.mxu0 0
    %158 = vmatpush1.bf16.xpose.msra.mxu0 0
    %159 = vmatprep.subr.bf16.mxu0 0
    %160 = vmatpush1.bf16.xpose.msra.mxu0 0
    %161 = vmatprep.subr.bf16.mxu0 0
    %162 = vmatpush1.bf16.xpose.msra.mxu0 0
    %163 = vmatprep.subr.bf16.mxu0 0
    %164 = vmatpush1.bf16.xpose.msra.mxu0 0
    %165 = vmatprep.subr.bf16.mxu0 0
    %166 = vmatpush1.bf16.xpose.msra.mxu0 0
    %167 = vmatprep.subr.bf16.mxu0 0
    %168 = vmatpush1.bf16.xpose.msra.mxu0 0
    %169 = vmatprep.subr.bf16.mxu0 0
    %170 = vmatpush1.bf16.xpose.msra.mxu0 0
    %171 = vmatprep.subr.bf16.mxu0 0
    %172 = vmatpush1.bf16.xpose.msra.mxu0 0
    %173 = vmatprep.subr.bf16.mxu0 0
    %174 = vmatpush1.bf16.xpose.msra.mxu0 0
    %175 = vmatprep.subr.bf16.mxu0 0
    %176 = vmatpush1.bf16.xpose.msra.mxu0 0
    %177 = vmatprep.subr.bf16.mxu0 0
    %178 = vmatpush1.bf16.xpose.msra.mxu0 0
    %179 = vmatprep.subr.bf16.mxu0 0
    %180 = vmatpush1.bf16.xpose.msra.mxu0 0
    %181 = vmatprep.mubr.bf16.mxu0 0
    %182 = vmatmul.mubr.bf16.gmra.mrb[0].mxu0 %v144
    %v183 = vpop.f32.mrb[0].mxu0
    %v184 = vadd.f32 %v69, %v183
    %v185 = vpop.f32.mrb[0].mxu0
    %v186 = vpop.f32.mrb[0].mxu0
    %v187 = vadd.f32 %v70, %v186
    %v188 = vpop.f32.mrb[0].mxu0
    %189 = vdwg.mxu0
    %vm190 = vcmask 130048
    %v191 = vsel %vm190, %v184, -inf
    %192 = vmax.xlane.f32.xlu0 %v191
    %v193 = vpop.xlane.xlu0 %192
    %v194 = vsel %vm190, %v187, -inf
    %195 = vmax.xlane.f32.xlu0 %v194
    %v196 = vpop.xlane.xlu0 %195
    %v197 = vsub.f32 %v184, %v193
    %v198 = vsub.f32 %v187, %v196
    %v199 = vmul.f32 %v197, 1.442695
    %v200 = vpow.pop %v199
    %v201 = vmul.f32 %v198, 1.442695
    %v202 = vpow.pop %v201
    %v203 = vsel %vm190, %v200, 0.0
    %204 = vadd.xlane.f32.xlu0 %v203
    %v205 = vpop.xlane.xlu0 %204
    %v206 = vsel %vm190, %v202, 0.0
    %207 = vadd.xlane.f32.xlu0 %v206
    %v208 = vpop.xlane.xlu0 %207
    %v209 = vrcp.pop %v205
    %v210 = vmul.f32 %v200, %v209
    %v211 = vrcp.pop %v208
    %v212 = vmul.f32 %v202, %v211
    %v213 = vpack.c.bf16 %v212, %v210
    %214 = vrot.lane.b32.xlu0 %v138, 64
    %v215 = vpop.permute.xlu0 %214
    %v218 = vsel %vm190, %v213, 0
    %220 = vmatprep.subr.bf16.mxu0 0
    %221 = vmatpush1.bf16.msra.mxu0 %v215
    %222 = vmatprep.subr.bf16.mxu0 0
    %223 = vmatpush1.bf16.msra.mxu0 0
    %224 = vmatprep.subr.bf16.mxu0 0
    %225 = vmatpush1.bf16.msra.mxu0 0
    %226 = vmatprep.subr.bf16.mxu0 0
    %227 = vmatpush1.bf16.msra.mxu0 0
    %228 = vmatprep.subr.bf16.mxu0 0
    %229 = vmatpush1.bf16.msra.mxu0 0
    %230 = vmatprep.subr.bf16.mxu0 0
    %231 = vmatpush1.bf16.msra.mxu0 0
    %232 = vmatprep.subr.bf16.mxu0 0
    %233 = vmatpush1.bf16.msra.mxu0 0
    %234 = vmatprep.subr.bf16.mxu0 0
    %235 = vmatpush1.bf16.msra.mxu0 0
    %236 = vmatprep.subr.bf16.mxu0 0
    %237 = vmatpush1.bf16.msra.mxu0 0
    %238 = vmatprep.subr.bf16.mxu0 0
    %239 = vmatpush1.bf16.msra.mxu0 0
    %240 = vmatprep.subr.bf16.mxu0 0
    %241 = vmatpush1.bf16.msra.mxu0 0
    %242 = vmatprep.subr.bf16.mxu0 0
    %243 = vmatpush1.bf16.msra.mxu0 0
    %244 = vmatprep.subr.bf16.mxu0 0
    %245 = vmatpush1.bf16.msra.mxu0 0
    %246 = vmatprep.subr.bf16.mxu0 0
    %247 = vmatpush1.bf16.msra.mxu0 0
    %248 = vmatprep.subr.bf16.mxu0 0
    %249 = vmatpush1.bf16.msra.mxu0 0
    %250 = vmatprep.subr.bf16.mxu0 0
    %251 = vmatpush1.bf16.msra.mxu0 0
    %252 = vmatprep.mubr.bf16.mxu0 0
    %253 = vmatmul.mubr.bf16.gmra.mrb[0].mxu0 %v218
    %v254 = vpop.f32.mrb[0].mxu0
    %v255 = vadd.f32 0.0, %v254
    %v256 = vpop.f32.mrb[0].mxu0
    %v257 = vpop.f32.mrb[0].mxu0
    %v258 = vadd.f32 0.0, %v257
    %v259 = vpop.f32.mrb[0].mxu0
    %260 = vdwg.mxu0
    %261 = vrot.lane.b32.xlu0 %v138, 120
    %v262 = vpop.permute.xlu0 %261
    %263 = vrot.lane.b32.xlu0 %v138, 88
    %v264 = vpop.permute.xlu0 %263
    %v266 = vsel %vm142, %v262, 0
    %v269 = vsel %vm142, %v264, 0
    %271 = vmatprep.subr.bf16.mxu0 0
    %272 = vmatpush1.bf16.xpose.msra.mxu0 %v269
    %273 = vmatprep.subr.bf16.mxu0 0
    %274 = vmatpush1.bf16.xpose.msra.mxu0 0
    %275 = vmatprep.subr.bf16.mxu0 0
    %276 = vmatpush1.bf16.xpose.msra.mxu0 0
    %277 = vmatprep.subr.bf16.mxu0 0
    %278 = vmatpush1.bf16.xpose.msra.mxu0 0
    %279 = vmatprep.subr.bf16.mxu0 0
    %280 = vmatpush1.bf16.xpose.msra.mxu0 0
    %281 = vmatprep.subr.bf16.mxu0 0
    %282 = vmatpush1.bf16.xpose.msra.mxu0 0
    %283 = vmatprep.subr.bf16.mxu0 0
    %284 = vmatpush1.bf16.xpose.msra.mxu0 0
    %285 = vmatprep.subr.bf16.mxu0 0
    %286 = vmatpush1.bf16.xpose.msra.mxu0 0
    %287 = vmatprep.subr.bf16.mxu0 0
    %288 = vmatpush1.bf16.xpose.msra.mxu0 0
    %289 = vmatprep.subr.bf16.mxu0 0
    %290 = vmatpush1.bf16.xpose.msra.mxu0 0
    %291 = vmatprep.subr.bf16.mxu0 0
    %292 = vmatpush1.bf16.xpose.msra.mxu0 0
    %293 = vmatprep.subr.bf16.mxu0 0
    %294 = vmatpush1.bf16.xpose.msra.mxu0 0
    %295 = vmatprep.subr.bf16.mxu0 0
    %296 = vmatpush1.bf16.xpose.msra.mxu0 0
    %297 = vmatprep.subr.bf16.mxu0 0
    %298 = vmatpush1.bf16.xpose.msra.mxu0 0
    %299 = vmatprep.subr.bf16.mxu0 0
    %300 = vmatpush1.bf16.xpose.msra.mxu0 0
    %301 = vmatprep.subr.bf16.mxu0 0
    %302 = vmatpush1.bf16.xpose.msra.mxu0 0
    %303 = vmatprep.mubr.bf16.mxu0 0
    %304 = vmatmul.mubr.bf16.gmra.mrb[0].mxu0 %v266
    %v305 = vpop.f32.mrb[0].mxu0
    %v306 = vadd.f32 %v69, %v305
    %v307 = vpop.f32.mrb[0].mxu0
    %v308 = vpop.f32.mrb[0].mxu0
    %v309 = vadd.f32 %v70, %v308
    %v310 = vpop.f32.mrb[0].mxu0
    %311 = vdwg.mxu0
    %v312 = vsel %vm190, %v306, -inf
    %313 = vmax.xlane.f32.xlu0 %v312
    %v314 = vpop.xlane.xlu0 %313
    %v315 = vsel %vm190, %v309, -inf
    %316 = vmax.xlane.f32.xlu0 %v315
    %v317 = vpop.xlane.xlu0 %316
    %v318 = vsub.f32 %v306, %v314
    %v319 = vsub.f32 %v309, %v317
    %v320 = vmul.f32 %v318, 1.442695
    %v321 = vpow.pop %v320
    %v322 = vmul.f32 %v319, 1.442695
    %v323 = vpow.pop %v322
    %v324 = vsel %vm190, %v321, 0.0
    %325 = vadd.xlane.f32.xlu0 %v324
    %v326 = vpop.xlane.xlu0 %325
    %v327 = vsel %vm190, %v323, 0.0
    %328 = vadd.xlane.f32.xlu0 %v327
    %v329 = vpop.xlane.xlu0 %328
    %v330 = vrcp.pop %v326
    %v331 = vmul.f32 %v321, %v330
    %v332 = vrcp.pop %v329
    %v333 = vmul.f32 %v323, %v332
    %v334 = vpack.c.bf16 %v333, %v331
    %335 = vrot.lane.b32.xlu0 %v138, 56
    %v336 = vpop.permute.xlu0 %335
    %v339 = vsel %vm190, %v334, 0
    %341 = vmatprep.subr.bf16.mxu0 0
    %342 = vmatpush1.bf16.msra.mxu0 %v336
    %343 = vmatprep.subr.bf16.mxu0 0
    %344 = vmatpush1.bf16.msra.mxu0 0
    %345 = vmatprep.subr.bf16.mxu0 0
    %346 = vmatpush1.bf16.msra.mxu0 0
    %347 = vmatprep.subr.bf16.mxu0 0
    %348 = vmatpush1.bf16.msra.mxu0 0
    %349 = vmatprep.subr.bf16.mxu0 0
    %350 = vmatpush1.bf16.msra.mxu0 0
    %351 = vmatprep.subr.bf16.mxu0 0
    %352 = vmatpush1.bf16.msra.mxu0 0
    %353 = vmatprep.subr.bf16.mxu0 0
    %354 = vmatpush1.bf16.msra.mxu0 0
    %355 = vmatprep.subr.bf16.mxu0 0
    %356 = vmatpush1.bf16.msra.mxu0 0
    %357 = vmatprep.subr.bf16.mxu0 0
    %358 = vmatpush1.bf16.msra.mxu0 0
    %359 = vmatprep.subr.bf16.mxu0 0
    %360 = vmatpush1.bf16.msra.mxu0 0
    %361 = vmatprep.subr.bf16.mxu0 0
    %362 = vmatpush1.bf16.msra.mxu0 0
    %363 = vmatprep.subr.bf16.mxu0 0
    %364 = vmatpush1.bf16.msra.mxu0 0
    %365 = vmatprep.subr.bf16.mxu0 0
    %366 = vmatpush1.bf16.msra.mxu0 0
    %367 = vmatprep.subr.bf16.mxu0 0
    %368 = vmatpush1.bf16.msra.mxu0 0
    %369 = vmatprep.subr.bf16.mxu0 0
    %370 = vmatpush1.bf16.msra.mxu0 0
    %371 = vmatprep.subr.bf16.mxu0 0
    %372 = vmatpush1.bf16.msra.mxu0 0
    %373 = vmatprep.mubr.bf16.mxu0 0
    %374 = vmatmul.mubr.bf16.gmra.mrb[0].mxu0 %v339
    %v375 = vpop.f32.mrb[0].mxu0
    %v376 = vadd.f32 0.0, %v375
    %v377 = vpop.f32.mrb[0].mxu0
    %v378 = vpop.f32.mrb[0].mxu0
    %v379 = vadd.f32 0.0, %v378
    %v380 = vpop.f32.mrb[0].mxu0
    %381 = vdwg.mxu0
    %382 = vrot.lane.b32.xlu0 %v138, 112
    %v383 = vpop.permute.xlu0 %382
    %384 = vrot.lane.b32.xlu0 %v138, 80
    %v385 = vpop.permute.xlu0 %384
    %v387 = vsel %vm142, %v383, 0
    %v390 = vsel %vm142, %v385, 0
    %392 = vmatprep.subr.bf16.mxu0 0
    %393 = vmatpush1.bf16.xpose.msra.mxu0 %v390
    %394 = vmatprep.subr.bf16.mxu0 0
    %395 = vmatpush1.bf16.xpose.msra.mxu0 0
    %396 = vmatprep.subr.bf16.mxu0 0
    %397 = vmatpush1.bf16.xpose.msra.mxu0 0
    %398 = vmatprep.subr.bf16.mxu0 0
    %399 = vmatpush1.bf16.xpose.msra.mxu0 0
    %400 = vmatprep.subr.bf16.mxu0 0
    %401 = vmatpush1.bf16.xpose.msra.mxu0 0
    %402 = vmatprep.subr.bf16.mxu0 0
    %403 = vmatpush1.bf16.xpose.msra.mxu0 0
    %404 = vmatprep.subr.bf16.mxu0 0
    %405 = vmatpush1.bf16.xpose.msra.mxu0 0
    %406 = vmatprep.subr.bf16.mxu0 0
    %407 = vmatpush1.bf16.xpose.msra.mxu0 0
    %408 = vmatprep.subr.bf16.mxu0 0
    %409 = vmatpush1.bf16.xpose.msra.mxu0 0
    %410 = vmatprep.subr.bf16.mxu0 0
    %411 = vmatpush1.bf16.xpose.msra.mxu0 0
    %412 = vmatprep.subr.bf16.mxu0 0
    %413 = vmatpush1.bf16.xpose.msra.mxu0 0
    %414 = vmatprep.subr.bf16.mxu0 0
    %415 = vmatpush1.bf16.xpose.msra.mxu0 0
    %416 = vmatprep.subr.bf16.mxu0 0
    %417 = vmatpush1.bf16.xpose.msra.mxu0 0
    %418 = vmatprep.subr.bf16.mxu0 0
    %419 = vmatpush1.bf16.xpose.msra.mxu0 0
    %420 = vmatprep.subr.bf16.mxu0 0
    %421 = vmatpush1.bf16.xpose.msra.mxu0 0
    %422 = vmatprep.subr.bf16.mxu0 0
    %423 = vmatpush1.bf16.xpose.msra.mxu0 0
    %424 = vmatprep.mubr.bf16.mxu0 0
    %425 = vmatmul.mubr.bf16.gmra.mrb[0].mxu0 %v387
    %v426 = vpop.f32.mrb[0].mxu0
    %v427 = vadd.f32 %v69, %v426
    %v428 = vpop.f32.mrb[0].mxu0
    %v429 = vpop.f32.mrb[0].mxu0
    %v430 = vadd.f32 %v70, %v429
    %v431 = vpop.f32.mrb[0].mxu0
    %432 = vdwg.mxu0
    %v433 = vsel %vm190, %v427, -inf
    %434 = vmax.xlane.f32.xlu0 %v433
    %v435 = vpop.xlane.xlu0 %434
    %v436 = vsel %vm190, %v430, -inf
    %437 = vmax.xlane.f32.xlu0 %v436
    %v438 = vpop.xlane.xlu0 %437
    %v439 = vsub.f32 %v427, %v435
    %v440 = vsub.f32 %v430, %v438
    %v441 = vmul.f32 %v439, 1.442695
    %v442 = vpow.pop %v441
    %v443 = vmul.f32 %v440, 1.442695
    %v444 = vpow.pop %v443
    %v445 = vsel %vm190, %v442, 0.0
    %446 = vadd.xlane.f32.xlu0 %v445
    %v447 = vpop.xlane.xlu0 %446
    %v448 = vsel %vm190, %v444, 0.0
    %449 = vadd.xlane.f32.xlu0 %v448
    %v450 = vpop.xlane.xlu0 %449
    %v451 = vrcp.pop %v447
    %v452 = vmul.f32 %v442, %v451
    %v453 = vrcp.pop %v450
    %v454 = vmul.f32 %v444, %v453
    %v455 = vpack.c.bf16 %v454, %v452
    %456 = vrot.lane.b32.xlu0 %v138, 48
    %v457 = vpop.permute.xlu0 %456
    %v460 = vsel %vm190, %v455, 0
    %462 = vmatprep.subr.bf16.mxu0 0
    %463 = vmatpush1.bf16.msra.mxu0 %v457
    %464 = vmatprep.subr.bf16.mxu0 0
    %465 = vmatpush1.bf16.msra.mxu0 0
    %466 = vmatprep.subr.bf16.mxu0 0
    %467 = vmatpush1.bf16.msra.mxu0 0
    %468 = vmatprep.subr.bf16.mxu0 0
    %469 = vmatpush1.bf16.msra.mxu0 0
    %470 = vmatprep.subr.bf16.mxu0 0
    %471 = vmatpush1.bf16.msra.mxu0 0
    %472 = vmatprep.subr.bf16.mxu0 0
    %473 = vmatpush1.bf16.msra.mxu0 0
    %474 = vmatprep.subr.bf16.mxu0 0
    %475 = vmatpush1.bf16.msra.mxu0 0
    %476 = vmatprep.subr.bf16.mxu0 0
    %477 = vmatpush1.bf16.msra.mxu0 0
    %478 = vmatprep.subr.bf16.mxu0 0
    %479 = vmatpush1.bf16.msra.mxu0 0
    %480 = vmatprep.subr.bf16.mxu0 0
    %481 = vmatpush1.bf16.msra.mxu0 0
    %482 = vmatprep.subr.bf16.mxu0 0
    %483 = vmatpush1.bf16.msra.mxu0 0
    %484 = vmatprep.subr.bf16.mxu0 0
    %485 = vmatpush1.bf16.msra.mxu0 0
    %486 = vmatprep.subr.bf16.mxu0 0
    %487 = vmatpush1.bf16.msra.mxu0 0
    %488 = vmatprep.subr.bf16.mxu0 0
    %489 = vmatpush1.bf16.msra.mxu0 0
    %490 = vmatprep.subr.bf16.mxu0 0
    %491 = vmatpush1.bf16.msra.mxu0 0
    %492 = vmatprep.subr.bf16.mxu0 0
    %493 = vmatpush1.bf16.msra.mxu0 0
    %494 = vmatprep.mubr.bf16.mxu0 0
    %495 = vmatmul.mubr.bf16.gmra.mrb[0].mxu0 %v460
    %v496 = vpop.f32.mrb[0].mxu0
    %v497 = vadd.f32 0.0, %v496
    %v498 = vpop.f32.mrb[0].mxu0
    %v499 = vpop.f32.mrb[0].mxu0
    %v500 = vadd.f32 0.0, %v499
    %v501 = vpop.f32.mrb[0].mxu0
    %502 = vdwg.mxu0
    %503 = vrot.lane.b32.xlu0 %v138, 104
    %v504 = vpop.permute.xlu0 %503
    %505 = vrot.lane.b32.xlu0 %v138, 72
    %v506 = vpop.permute.xlu0 %505
    %v508 = vsel %vm142, %v504, 0
    %v511 = vsel %vm142, %v506, 0
    %513 = vmatprep.subr.bf16.mxu0 0
    %514 = vmatpush1.bf16.xpose.msra.mxu0 %v511
    %515 = vmatprep.subr.bf16.mxu0 0
    %516 = vmatpush1.bf16.xpose.msra.mxu0 0
    %517 = vmatprep.subr.bf16.mxu0 0
    %518 = vmatpush1.bf16.xpose.msra.mxu0 0
    %519 = vmatprep.subr.bf16.mxu0 0
    %520 = vmatpush1.bf16.xpose.msra.mxu0 0
    %521 = vmatprep.subr.bf16.mxu0 0
    %522 = vmatpush1.bf16.xpose.msra.mxu0 0
    %523 = vmatprep.subr.bf16.mxu0 0
    %524 = vmatpush1.bf16.xpose.msra.mxu0 0
    %525 = vmatprep.subr.bf16.mxu0 0
    %526 = vmatpush1.bf16.xpose.msra.mxu0 0
    %527 = vmatprep.subr.bf16.mxu0 0
    %528 = vmatpush1.bf16.xpose.msra.mxu0 0
    %529 = vmatprep.subr.bf16.mxu0 0
    %530 = vmatpush1.bf16.xpose.msra.mxu0 0
    %531 = vmatprep.subr.bf16.mxu0 0
    %532 = vmatpush1.bf16.xpose.msra.mxu0 0
    %533 = vmatprep.subr.bf16.mxu0 0
    %534 = vmatpush1.bf16.xpose.msra.mxu0 0
    %535 = vmatprep.subr.bf16.mxu0 0
    %536 = vmatpush1.bf16.xpose.msra.mxu0 0
    %537 = vmatprep.subr.bf16.mxu0 0
    %538 = vmatpush1.bf16.xpose.msra.mxu0 0
    %539 = vmatprep.subr.bf16.mxu0 0
    %540 = vmatpush1.bf16.xpose.msra.mxu0 0
    %541 = vmatprep.subr.bf16.mxu0 0
    %542 = vmatpush1.bf16.xpose.msra.mxu0 0
    %543 = vmatprep.subr.bf16.mxu0 0
    %544 = vmatpush1.bf16.xpose.msra.mxu0 0
    %545 = vmatprep.mubr.bf16.mxu0 0
    %546 = vmatmul.mubr.bf16.gmra.mrb[0].mxu0 %v508
    %v547 = vpop.f32.mrb[0].mxu0
    %v548 = vadd.f32 %v69, %v547
    %v549 = vpop.f32.mrb[0].mxu0
    %v550 = vpop.f32.mrb[0].mxu0
    %v551 = vadd.f32 %v70, %v550
    %v552 = vpop.f32.mrb[0].mxu0
    %553 = vdwg.mxu0
    %v554 = vsel %vm190, %v548, -inf
    %555 = vmax.xlane.f32.xlu0 %v554
    %v556 = vpop.xlane.xlu0 %555
    %v557 = vsel %vm190, %v551, -inf
    %558 = vmax.xlane.f32.xlu0 %v557
    %v559 = vpop.xlane.xlu0 %558
    %v560 = vsub.f32 %v548, %v556
    %v561 = vsub.f32 %v551, %v559
    %v562 = vmul.f32 %v560, 1.442695
    %v563 = vpow.pop %v562
    %v564 = vmul.f32 %v561, 1.442695
    %v565 = vpow.pop %v564
    %v566 = vsel %vm190, %v563, 0.0
    %567 = vadd.xlane.f32.xlu0 %v566
    %v568 = vpop.xlane.xlu0 %567
    %v569 = vsel %vm190, %v565, 0.0
    %570 = vadd.xlane.f32.xlu0 %v569
    %v571 = vpop.xlane.xlu0 %570
    %v572 = vrcp.pop %v568
    %v573 = vmul.f32 %v563, %v572
    %v574 = vrcp.pop %v571
    %v575 = vmul.f32 %v565, %v574
    %v576 = vpack.c.bf16 %v575, %v573
    %577 = vrot.lane.b32.xlu0 %v138, 40
    %v578 = vpop.permute.xlu0 %577
    %v581 = vsel %vm190, %v576, 0
    %583 = vmatprep.subr.bf16.mxu0 0
    %584 = vmatpush1.bf16.msra.mxu0 %v578
    %585 = vmatprep.subr.bf16.mxu0 0
    %586 = vmatpush1.bf16.msra.mxu0 0
    %587 = vmatprep.subr.bf16.mxu0 0
    %588 = vmatpush1.bf16.msra.mxu0 0
    %589 = vmatprep.subr.bf16.mxu0 0
    %590 = vmatpush1.bf16.msra.mxu0 0
    %591 = vmatprep.subr.bf16.mxu0 0
    %592 = vmatpush1.bf16.msra.mxu0 0
    %593 = vmatprep.subr.bf16.mxu0 0
    %594 = vmatpush1.bf16.msra.mxu0 0
    %595 = vmatprep.subr.bf16.mxu0 0
    %596 = vmatpush1.bf16.msra.mxu0 0
    %597 = vmatprep.subr.bf16.mxu0 0
    %598 = vmatpush1.bf16.msra.mxu0 0
    %599 = vmatprep.subr.bf16.mxu0 0
    %600 = vmatpush1.bf16.msra.mxu0 0
    %601 = vmatprep.subr.bf16.mxu0 0
    %602 = vmatpush1.bf16.msra.mxu0 0
    %603 = vmatprep.subr.bf16.mxu0 0
    %604 = vmatpush1.bf16.msra.mxu0 0
    %605 = vmatprep.subr.bf16.mxu0 0
    %606 = vmatpush1.bf16.msra.mxu0 0
    %607 = vmatprep.subr.bf16.mxu0 0
    %608 = vmatpush1.bf16.msra.mxu0 0
    %609 = vmatprep.subr.bf16.mxu0 0
    %610 = vmatpush1.bf16.msra.mxu0 0
    %611 = vmatprep.subr.bf16.mxu0 0
    %612 = vmatpush1.bf16.msra.mxu0 0
    %613 = vmatprep.subr.bf16.mxu0 0
    %614 = vmatpush1.bf16.msra.mxu0 0
    %615 = vmatprep.mubr.bf16.mxu0 0
    %616 = vmatmul.mubr.bf16.gmra.mrb[0].mxu0 %v581
    %v617 = vpop.f32.mrb[0].mxu0
    %v618 = vadd.f32 0.0, %v617
    %v619 = vpop.f32.mrb[0].mxu0
    %v620 = vpop.f32.mrb[0].mxu0
    %v621 = vadd.f32 0.0, %v620
    %v622 = vpop.f32.mrb[0].mxu0
    %623 = vdwg.mxu0
    %626 = vrot.lane.b32.xlu0 %v376, 8
    %v627 = vpop.permute.xlu0 %626
    %628 = vrot.lane.b32.xlu0 %v379, 8
    %v629 = vpop.permute.xlu0 %628
    %634 = vrot.lane.b32.xlu0 %v497, 16
    %v635 = vpop.permute.xlu0 %634
    %636 = vrot.lane.b32.xlu0 %v500, 16
    %v637 = vpop.permute.xlu0 %636
    %642 = vrot.lane.b32.xlu0 %v618, 24
    %v643 = vpop.permute.xlu0 %642
    %644 = vrot.lane.b32.xlu0 %v621, 24
    %v645 = vpop.permute.xlu0 %644
    %v648 = vsel %vm142, %v255, %v627
    %v649 = vsel %vm142, %v258, %v629
    %v650 = vsel %vm190, %v648, %v635
    %v651 = vsel %vm190, %v649, %v637
    %vm652 = vcmask 195584
    %v653 = vsel %vm652, %v650, %v643
    %v654 = vsel %vm652, %v651, %v645
    %v655 = vpack.c.bf16 %v654, %v653
    %v656 = vld [vmem:[#allocation2] sm:$0xf]
    %v657 = vld [vmem:[#allocation2 + $0x4] sm:$0xf]
    %v658 = vld [vmem:[#allocation2 + $0x8] sm:$0xf]
    %v659 = vld [vmem:[#allocation2 + $0xc] sm:$0xf]
    %v660 = vlaneseq
    %v661 = vshrl.u32 %v660, 7
    %v662 = vsub.s32 1, %v661
    %v663 = vrot.slane %v71, %v662
    %v668 = vunpack.c.l.b16 %v656
    %v669 = vunpack.c.l.b16 %v657
    %v670 = vunpack.c.l.b16 %v658
    %v671 = vunpack.c.l.b16 %v659
    %v672 = vpack.c.b16 %v669, %v668
    %v673 = vpack.c.b16 %v671, %v670
    %v677 = vsel %vm93, %v655, 0
    %679 = vmatprep.subr.bf16.mxu0 0
    %680 = vmatpush1.bf16.msra.mxu0 %v672
    %681 = vmatprep.subr.bf16.mxu0 0
    %682 = vmatpush1.bf16.msra.mxu0 %v673
    %683 = vmatprep.subr.bf16.mxu0 0
    %684 = vmatpush1.bf16.msra.mxu0 0
    %685 = vmatprep.subr.bf16.mxu0 0
    %686 = vmatpush1.bf16.msra.mxu0 0
    %687 = vmatprep.subr.bf16.mxu0 0
    %688 = vmatpush1.bf16.msra.mxu0 0
    %689 = vmatprep.subr.bf16.mxu0 0
    %690 = vmatpush1.bf16.msra.mxu0 0
    %691 = vmatprep.subr.bf16.mxu0 0
    %692 = vmatpush1.bf16.msra.mxu0 0
    %693 = vmatprep.subr.bf16.mxu0 0
    %694 = vmatpush1.bf16.msra.mxu0 0
    %695 = vmatprep.subr.bf16.mxu0 0
    %696 = vmatpush1.bf16.msra.mxu0 0
    %697 = vmatprep.subr.bf16.mxu0 0
    %698 = vmatpush1.bf16.msra.mxu0 0
    %699 = vmatprep.subr.bf16.mxu0 0
    %700 = vmatpush1.bf16.msra.mxu0 0
    %701 = vmatprep.subr.bf16.mxu0 0
    %702 = vmatpush1.bf16.msra.mxu0 0
    %703 = vmatprep.subr.bf16.mxu0 0
    %704 = vmatpush1.bf16.msra.mxu0 0
    %705 = vmatprep.subr.bf16.mxu0 0
    %706 = vmatpush1.bf16.msra.mxu0 0
    %707 = vmatprep.subr.bf16.mxu0 0
    %708 = vmatpush1.bf16.msra.mxu0 0
    %709 = vmatprep.subr.bf16.mxu0 0
    %710 = vmatpush1.bf16.msra.mxu0 0
    %711 = vmatprep.mubr.bf16.mxu0 0
    %712 = vmatmul.mubr.bf16.gmra.mrb[0].mxu0 %v677
    %v713 = vpop.f32.mrb[0].mxu0
    %v714 = vadd.f32 %v663, %v713
    %v715 = vpop.f32.mrb[0].mxu0
    %v716 = vpop.f32.mrb[0].mxu0
    %v717 = vadd.f32 %v663, %v716
    %v718 = vpop.f32.mrb[0].mxu0
    %719 = vdwg.mxu0
    %v720 = vadd.f32 %v67, %v714
    %v721 = vadd.f32 %v68, %v717
    %v722 = vsel %vm93, %v720, 0.0
    %723 = vadd.xlane.f32.xlu0 %v722
    %v724 = vpop.xlane.xlu0 %723
    %v725 = vsel %vm93, %v721, 0.0
    %726 = vadd.xlane.f32.xlu0 %v725
    %v727 = vpop.xlane.xlu0 %726
    %v728 = vrcp.pop 32.0
    %v729 = vmul.f32 %v724, %v728
    %v730 = vmul.f32 %v727, %v728
    %v731 = vsub.f32 %v720, %v729
    %v732 = vsub.f32 %v721, %v730
    %v733 = vmul.f32 %v731, %v731
    %v734 = vmul.f32 %v732, %v732
    %v735 = vsel %vm93, %v733, 0.0
    %736 = vadd.xlane.f32.xlu0 %v735
    %v737 = vpop.xlane.xlu0 %736
    %v738 = vsel %vm93, %v734, 0.0
    %739 = vadd.xlane.f32.xlu0 %v738
    %v740 = vpop.xlane.xlu0 %739
    %v741 = vmul.f32 %v737, %v728
    %v742 = vmul.f32 %v740, %v728
    %v743 = vadd.f32 %v741, 1e-05
    %v744 = vadd.f32 %v742, 1e-05
    %v745 = vrsqrt.pop %v743
    %v746 = vrsqrt.pop %v744
    %v747 = vmul.f32 %v731, %v745
    %v748 = vmul.f32 %v732, %v746
    %v749 = vlaneseq
    %v750 = vshrl.u32 %v749, 7
    %v751 = vsub.s32 2, %v750
    %v752 = vrot.slane %v71, %v751
    %v753 = vmul.f32 %v747, %v752
    %v754 = vmul.f32 %v748, %v752
    %v755 = vlaneseq
    %v756 = vshrl.u32 %v755, 7
    %v757 = vsub.s32 3, %v756
    %v758 = vrot.slane %v71, %v757
    %v759 = vadd.f32 %v753, %v758
    %v760 = vadd.f32 %v754, %v758
    %v761 = vpack.c.bf16 %v760, %v759
    %v762 = vld [vmem:[#allocation5] sm:$0xf]
    %v763 = vld [vmem:[#allocation5 + $0x4] sm:$0xf]
    %v764 = vld [vmem:[#allocation5 + $0x8] sm:$0xf]
    %v765 = vld [vmem:[#allocation5 + $0xc] sm:$0xf]
    %v766 = vlaneseq
    %v767 = vshrl.u32 %v766, 7
    %v768 = vsub.s32 4, %v767
    %v769 = vrot.slane %v71, %v768
    %v774 = vunpack.c.l.b16 %v762
    %v775 = vunpack.c.l.b16 %v763
    %v776 = vunpack.c.l.b16 %v764
    %v777 = vunpack.c.l.b16 %v765
    %v778 = vpack.c.b16 %v775, %v774
    %v779 = vpack.c.b16 %v777, %v776
    %v783 = vsel %vm93, %v761, 0
    %785 = vmatprep.subr.bf16.mxu0 0
    %786 = vmatpush1.bf16.msra.mxu0 %v778
    %787 = vmatprep.subr.bf16.mxu0 0
    %788 = vmatpush1.bf16.msra.mxu0 %v779
    %789 = vmatprep.subr.bf16.mxu0 0
    %790 = vmatpush1.bf16.msra.mxu0 0
    %791 = vmatprep.subr.bf16.mxu0 0
    %792 = vmatpush1.bf16.msra.mxu0 0
    %793 = vmatprep.subr.bf16.mxu0 0
    %794 = vmatpush1.bf16.msra.mxu0 0
    %795 = vmatprep.subr.bf16.mxu0 0
    %796 = vmatpush1.bf16.msra.mxu0 0
    %797 = vmatprep.subr.bf16.mxu0 0
    %798 = vmatpush1.bf16.msra.mxu0 0
    %799 = vmatprep.subr.bf16.mxu0 0
    %800 = vmatpush1.bf16.msra.mxu0 0
    %801 = vmatprep.subr.bf16.mxu0 0
    %802 = vmatpush1.bf16.msra.mxu0 0
    %803 = vmatprep.subr.bf16.mxu0 0
    %804 = vmatpush1.bf16.msra.mxu0 0
    %805 = vmatprep.subr.bf16.mxu0 0
    %806 = vmatpush1.bf16.msra.mxu0 0
    %807 = vmatprep.subr.bf16.mxu0 0
    %808 = vmatpush1.bf16.msra.mxu0 0
    %809 = vmatprep.subr.bf16.mxu0 0
    %810 = vmatpush1.bf16.msra.mxu0 0
    %811 = vmatprep.subr.bf16.mxu0 0
    %812 = vmatpush1.bf16.msra.mxu0 0
    %813 = vmatprep.subr.bf16.mxu0 0
    %814 = vmatpush1.bf16.msra.mxu0 0
    %815 = vmatprep.subr.bf16.mxu0 0
    %816 = vmatpush1.bf16.msra.mxu0 0
    %817 = vmatprep.mubr.bf16.mxu0 0
    %818 = vmatmul.mubr.bf16.gmra.mrb[0].mxu0 %v783
    %v819 = vpop.f32.mrb[0].mxu0
    %v820 = vadd.f32 %v769, %v819
    %v821 = vpop.f32.mrb[0].mxu0
    %v822 = vpop.f32.mrb[0].mxu0
    %v823 = vadd.f32 %v769, %v822
    %v824 = vpop.f32.mrb[0].mxu0
    %825 = vdwg.mxu0
    %v826 = vmax.f32 %v820, 0.0
    %v827 = vmax.f32 %v823, 0.0
    %v828 = vpack.c.bf16 %v827, %v826
    %v829 = vld [vmem:[%s5] sm:$0xf]
    %v830 = vld [vmem:[%s5 + $0x4] sm:$0xf]
    %v831 = vld [vmem:[%s5 + $0x8] sm:$0xf]
    %v832 = vld [vmem:[%s5 + $0xc] sm:$0xf]
    %v833 = vld [vmem:[%s5 + $0x10] sm:$0xf]
    %v834 = vld [vmem:[%s5 + $0x14] sm:$0xf]
    %v835 = vld [vmem:[%s5 + $0x18] sm:$0xf]
    %v836 = vld [vmem:[%s5 + $0x1c] sm:$0xf]
    %v837 = vlaneseq
    %v838 = vshrl.u32 %v837, 7
    %v839 = vsub.s32 5, %v838
    %v840 = vrot.slane %v71, %v839
    %v849 = vunpack.c.l.b16 %v829
    %v850 = vunpack.c.l.b16 %v830
    %v851 = vunpack.c.l.b16 %v831
    %v852 = vunpack.c.l.b16 %v832
    %v853 = vunpack.c.l.b16 %v833
    %v854 = vunpack.c.l.b16 %v834
    %v855 = vunpack.c.l.b16 %v835
    %v856 = vunpack.c.l.b16 %v836
    %v857 = vpack.c.b16 %v850, %v849
    %v858 = vpack.c.b16 %v852, %v851
    %v859 = vpack.c.b16 %v854, %v853
    %v860 = vpack.c.b16 %v856, %v855
    %vm865 = vcmask 523264
    %v867 = vsel %vm865, %v828, 0
    %869 = vmatprep.subr.bf16.mxu0 0
    %870 = vmatpush1.bf16.msra.mxu0 %v857
    %871 = vmatprep.subr.bf16.mxu0 0
    %872 = vmatpush1.bf16.msra.mxu0 %v858
    %873 = vmatprep.subr.bf16.mxu0 0
    %874 = vmatpush1.bf16.msra.mxu0 %v859
    %875 = vmatprep.subr.bf16.mxu0 0
    %876 = vmatpush1.bf16.msra.mxu0 %v860
    %877 = vmatprep.subr.bf16.mxu0 0
    %878 = vmatpush1.bf16.msra.mxu0 0
    %879 = vmatprep.subr.bf16.mxu0 0
    %880 = vmatpush1.bf16.msra.mxu0 0
    %881 = vmatprep.subr.bf16.mxu0 0
    %882 = vmatpush1.bf16.msra.mxu0 0
    %883 = vmatprep.subr.bf16.mxu0 0
    %884 = vmatpush1.bf16.msra.mxu0 0
    %885 = vmatprep.subr.bf16.mxu0 0
    %886 = vmatpush1.bf16.msra.mxu0 0
    %887 = vmatprep.subr.bf16.mxu0 0
    %888 = vmatpush1.bf16.msra.mxu0 0
    %889 = vmatprep.subr.bf16.mxu0 0
    %890 = vmatpush1.bf16.msra.mxu0 0
    %891 = vmatprep.subr.bf16.mxu0 0
    %892 = vmatpush1.bf16.msra.mxu0 0
    %893 = vmatprep.subr.bf16.mxu0 0
    %894 = vmatpush1.bf16.msra.mxu0 0
    %895 = vmatprep.subr.bf16.mxu0 0
    %896 = vmatpush1.bf16.msra.mxu0 0
    %897 = vmatprep.subr.bf16.mxu0 0
    %898 = vmatpush1.bf16.msra.mxu0 0
    %899 = vmatprep.subr.bf16.mxu0 0
    %900 = vmatpush1.bf16.msra.mxu0 0
    %901 = vmatprep.mubr.bf16.mxu0 0
    %902 = vmatmul.mubr.bf16.gmra.mrb[0].mxu0 %v867
    %v903 = vpop.f32.mrb[0].mxu0
    %v904 = vadd.f32 %v840, %v903
    %v905 = vpop.f32.mrb[0].mxu0
    %v906 = vpop.f32.mrb[0].mxu0
    %v907 = vadd.f32 %v840, %v906
    %v908 = vpop.f32.mrb[0].mxu0
    %909 = vdwg.mxu0
    %v910 = vadd.f32 %v759, %v904
    %v911 = vadd.f32 %v760, %v907
    %v912 = vsel %vm93, %v910, 0.0
    %913 = vadd.xlane.f32.xlu0 %v912
    %v914 = vpop.xlane.xlu0 %913
    %v915 = vsel %vm93, %v911, 0.0
    %916 = vadd.xlane.f32.xlu0 %v915
    %v917 = vpop.xlane.xlu0 %916
    %v918 = vmul.f32 %v914, %v728
    %v919 = vmul.f32 %v917, %v728
    %v920 = vsub.f32 %v910, %v918
    %v921 = vsub.f32 %v911, %v919
    %v922 = vmul.f32 %v920, %v920
    %v923 = vmul.f32 %v921, %v921
    %v924 = vsel %vm93, %v922, 0.0
    %925 = vadd.xlane.f32.xlu0 %v924
    %v926 = vpop.xlane.xlu0 %925
    %v927 = vsel %vm93, %v923, 0.0
    %928 = vadd.xlane.f32.xlu0 %v927
    %v929 = vpop.xlane.xlu0 %928
    %v930 = vmul.f32 %v926, %v728
    %v931 = vmul.f32 %v929, %v728
    %v932 = vadd.f32 %v930, 1e-05
    %v933 = vadd.f32 %v931, 1e-05
    %v934 = vrsqrt.pop %v932
    %v935 = vrsqrt.pop %v933
    %v936 = vmul.f32 %v920, %v934
    %v937 = vmul.f32 %v921, %v935
    %v938 = vlaneseq
    %v939 = vshrl.u32 %v938, 7
    %v940 = vsub.s32 6, %v939
    %v941 = vrot.slane %v71, %v940
    %v942 = vmul.f32 %v936, %v941
    %v943 = vmul.f32 %v937, %v941
    %v944 = vlaneseq
    %v945 = vshrl.u32 %v944, 7
    %v946 = vsub.s32 7, %v945
    %v947 = vrot.slane %v71, %v946
    %v948 = vadd.f32 %v942, %v947
    %v949 = vadd.f32 %v943, %v947
    %950 = vst.msk [vmem:[#allocation8] sm:$0xff] %vm93, %v948
    %951 = vst.msk [vmem:[#allocation8 + $0x8] sm:$0xff] %vm93, %v949
    // Predicated region
    $region42: #{tpu_custom_call.1} parent=1 // pred_check
      _
    $region43: #{tpu_custom_call.1} parent=1 // pred_check_branch
      %953 = sbr.rel (0) target = $region45
    $region44: #{tpu_custom_call.1} parent=1 // pred_region
      %s955 = ssub.s32 256, 256
      %956 = vsyncadd [#allocation4], %s955
      %s957 = sshll.u32 [#allocation8], 4
      %s958 = int_to_ptr.vmem [resolvable:$true] %s957
      %963 = dma.vmem_to_hbm [thread:$0]  %s958, 256, %s7, [#allocation4], 128, 128, 8
    $region45: #{tpu_custom_call.1} parent=1 // pred_fallthru
      _
    // Predicated region
    $region46: #{tpu_custom_call.1} parent=1 // pred_check
      _
    $region47: #{tpu_custom_call.1} parent=1 // pred_check_branch
      %965 = sbr.rel (0) target = $region49
    $region48: #{tpu_custom_call.1} parent=1 // pred_region
      %966 = dma.done [#allocation4], 256
    $region49: #{tpu_custom_call.1} parent=1 // pred_fallthru
      _
    %967 = vsyncpa [#allocation3], 1
    %968 = vsyncpa [#allocation6], 1
    %969 = vsyncpa [#allocation4], 1

</llo_original>
